<compile_context>
chip_gen: v7x
topology: tpu7x:2x2x1
jax: 0.10.0
libtpu: 0.0.40
codegen_flags: <defaults>
</compile_context>

<pallas_src>
import functools
import math

import jax
import jax.numpy as jnp
from jax.experimental import pallas as pl
from jax.experimental.pallas import tpu as pltpu


def _layernorm_pre_kernel(x_ref, o_ref, *, eps):
    # x_ref / o_ref: (TILE_ROWS, D) blocks. All stats in f32, cast back on store.
    xf = x_ref[...].astype(jnp.float32)
    mean = jnp.mean(xf, axis=-1, keepdims=True)
    # Two-pass variance (same numerics as the PyTorch reference). The subtract +
    # square feed straight into the reduction, so no full-tile centered temporary
    # needs to be stored and reloaded.
    var = jnp.mean(jnp.square(xf - mean), axis=-1, keepdims=True)
    inv = jax.lax.rsqrt(var + eps)  # EUP rsqrt; scale = 1 / inv
    # Recompute the centering at the output in distributed form so it shares no
    # large subexpression with the variance pass (avoids an xc materialization).
    o_ref[...] = (xf * inv - mean * inv).astype(o_ref.dtype)


def _tpu_budgets():
    """(vmem_budget_bytes, vmem_limit_bytes, num_tensorcores) — generation aware, defensive."""
    vmem_cap = 64 * 1024 * 1024  # conservative default (v7x-sized VMEM)
    num_tc = 1
    try:
        info = pltpu.get_tpu_info()
        cap = getattr(info, "vmem_capacity_bytes", None)
        if cap:
            vmem_cap = int(cap)
        for attr in ("num_cores", "num_tensorcores", "tensorcores_per_chip", "cores_per_chip"):
            v = getattr(info, attr, None)
            if v:
                num_tc = int(v)
                break
    except Exception:
        pass
    try:
        kind = jax.devices()[0].device_kind.lower()
        # v7x has 2 TensorCores per chip; v4 / v5p are megacore (2 TCs per device).
        if any(tag in kind for tag in ("v7", "v4", "v5p", "v5 p")):
            num_tc = max(num_tc, 2)
    except Exception:
        pass
    budget = vmem_cap // 2          # ~64 MiB on 128 MiB parts, ~32 MiB on v7x
    vmem_limit = (vmem_cap * 3) // 4  # ~96 MiB on 128 MiB parts, ~48 MiB on v7x
    return budget, vmem_limit, num_tc


def _pick_tile_rows(rows, d, itemsize, budget_bytes, num_tensorcores):
    """Largest row-tile fitting the VMEM budget, rounded to the dtype's sublane packing."""
    # Rows per packed sublane tile: 8 for f32, 16 for bf16, 32 for int8/fp8.
    packing = 8 * max(1, 4 // max(1, itemsize))
    # Double-buffered input + output tiles, plus ~3 live f32 intermediates per element.
    bytes_per_row = d * (4 * itemsize + 12)
    t = budget_bytes // max(bytes_per_row, 1)
    t = max(packing, (int(t) // packing) * packing)
    # Never exceed the total row count (rounded up to packing granularity).
    rows_rounded = -(-rows // packing) * packing
    t = min(t, rows_rounded)
    if num_tensorcores >= 2:
        # Aim for >= 4 grid steps per TensorCore so both cores get work and the
        # DMA pipeline stays overlapped; only binds when rows are large enough.
        target_steps = 4 * num_tensorcores
        per_step = -(-rows // target_steps)
        per_step = -(-per_step // packing) * packing
        t = min(t, max(per_step, packing))
    return max(t, packing)


def layernorm_pre(x, *, eps=1e-5, tile_rows=None):
    """LayerNormPre over the last axis of x (center + normalize, no affine)."""
    orig_shape = x.shape
    d = orig_shape[-1]
    rows = int(math.prod(orig_shape[:-1])) if len(orig_shape) > 1 else 1
    x2 = x.reshape(rows, d)

    budget, vmem_limit, num_tc = _tpu_budgets()
    if tile_rows is None:
        tile_rows = _pick_tile_rows(rows, d, jnp.dtype(x.dtype).itemsize, budget, num_tc)

    grid = pl.cdiv(rows, tile_rows)
    kernel = functools.partial(_layernorm_pre_kernel, eps=eps)

    out = pl.pallas_call(
        kernel,
        out_shape=jax.ShapeDtypeStruct((rows, d), x.dtype),
        grid_spec=pltpu.PrefetchScalarGridSpec(
            num_scalar_prefetch=0,
            grid=(grid,),
            in_specs=[pl.BlockSpec((tile_rows, d), lambda i: (i, 0))],
            out_specs=pl.BlockSpec((tile_rows, d), lambda i: (i, 0)),
        ),
        compiler_params=pltpu.CompilerParams(
            dimension_semantics=("parallel",),
            vmem_limit_bytes=int(vmem_limit),
        ),
    )(x2)

    return out.reshape(orig_shape)


def _reference(x, eps):
    xf = x.astype(jnp.float32)
    xc = xf - jnp.mean(xf, axis=-1, keepdims=True)
    scale = jnp.sqrt(jnp.mean(xc * xc, axis=-1, keepdims=True) + eps)
    return (xc / scale).astype(x.dtype)


if __name__ == "__main__":
    eps = 1e-5
    key = jax.random.PRNGKey(0)

    # Small shape consistent with the module: [batch, pos, d_model].
    batch, seq, d_model = 2, 8, 32
    x = jax.random.normal(key, (batch, seq, d_model), dtype=jnp.float32)

    out = jax.block_until_ready(layernorm_pre(x, eps=eps))
    ref = _reference(x, eps)
    assert jnp.allclose(out, ref, atol=1e-5, rtol=1e-5), "mismatch vs reference"

    # Rows not a multiple of the row tile (exercises the no-pad masked boundary block).
    key2 = jax.random.PRNGKey(1)
    x_odd = jax.random.normal(key2, (3, 5, d_model), dtype=jnp.float32)
    out_odd = jax.block_until_ready(layernorm_pre(x_odd, eps=eps))
    ref_odd = _reference(x_odd, eps)
    assert jnp.allclose(out_odd, ref_odd, atol=1e-5, rtol=1e-5), "mismatch (ragged rows)"

    # bf16 activations (exercises the sublane-packing-aware tile rounding + f32 stats).
    x_bf16 = jax.random.normal(key2, (2, 7, d_model), dtype=jnp.float32).astype(jnp.bfloat16)
    out_bf16 = jax.block_until_ready(layernorm_pre(x_bf16, eps=eps))
    ref_bf16 = _reference(x_bf16, eps)
    assert jnp.allclose(out_bf16.astype(jnp.float32), ref_bf16.astype(jnp.float32),
                        atol=2e-2, rtol=2e-2), "mismatch (bf16)"

    print("KERNEL_OK")
</pallas_src>

<mosaic_0001>
module attributes {stable_mosaic.version = 11 : i64} {
  func.func @_layernorm_pre_kernel(%arg0: i32, %arg1: memref<16x32xf32, #tpu.memory_space<vmem>>, %arg2: memref<16x32xf32, #tpu.memory_space<vmem>>) attributes {dimension_semantics = [#tpu.dimension_semantics<parallel>], iteration_bounds = array<i64: 1>, scalar_prefetch = 0 : i64, scratch_operands = 0 : i64, tpu.core_type = #tpu.core_type<tc>, window_params = [{transform_indices = @transform_0, window_bounds = array<i64: 16, 32>}, {transform_indices = @transform_1, window_bounds = array<i64: 16, 32>}]} {
    %c0 = arith.constant 0 : index
    %c0_0 = arith.constant 0 : index
    %0 = vector.load %arg1[%c0, %c0_0] : memref<16x32xf32, #tpu.memory_space<vmem>>, vector<16x32xf32>
    %cst = arith.constant dense<0.000000e+00> : vector<16xf32>
    %1 = vector.multi_reduction <add>, %0, %cst [1] : vector<16x32xf32> to vector<16xf32>
    %2 = vector.shape_cast %1 : vector<16xf32> to vector<16x1xf32>
    %cst_1 = arith.constant 3.200000e+01 : f32
    %3 = vector.broadcast %cst_1 : f32 to vector<16x1xf32>
    %4 = arith.divf %2, %3 : vector<16x1xf32>
    %5 = vector.broadcast %4 : vector<16x1xf32> to vector<16x32xf32>
    %6 = arith.subf %0, %5 : vector<16x32xf32>
    %7 = arith.mulf %6, %6 : vector<16x32xf32>
    %cst_2 = arith.constant dense<0.000000e+00> : vector<16xf32>
    %8 = vector.multi_reduction <add>, %7, %cst_2 [1] : vector<16x32xf32> to vector<16xf32>
    %9 = vector.shape_cast %8 : vector<16xf32> to vector<16x1xf32>
    %cst_3 = arith.constant 3.200000e+01 : f32
    %10 = vector.broadcast %cst_3 : f32 to vector<16x1xf32>
    %11 = arith.divf %9, %10 : vector<16x1xf32>
    %cst_4 = arith.constant 9.99999974E-6 : f32
    %12 = vector.broadcast %cst_4 : f32 to vector<16x1xf32>
    %13 = arith.addf %11, %12 : vector<16x1xf32>
    %14 = math.rsqrt %13 : vector<16x1xf32>
    %15 = vector.broadcast %14 : vector<16x1xf32> to vector<16x32xf32>
    %16 = arith.mulf %0, %15 : vector<16x32xf32>
    %17 = arith.mulf %4, %14 : vector<16x1xf32>
    %18 = vector.broadcast %17 : vector<16x1xf32> to vector<16x32xf32>
    %19 = arith.subf %16, %18 : vector<16x32xf32>
    %c0_5 = arith.constant 0 : index
    %c0_6 = arith.constant 0 : index
    %20 = vector.load %arg2[%c0_5, %c0_6] : memref<16x32xf32, #tpu.memory_space<vmem>>, vector<16x32xf32>
    tpu.vector_store %arg2[%c0_5, %c0_6], %19 {strides = array<i32>} : memref<16x32xf32, #tpu.memory_space<vmem>>, vector<16x32xf32>,
    return
  }
  func.func @transform_0(%arg0: i32) -> (i32, i32) {
    %c0_i32 = arith.constant 0 : i32
    %c0_i32_0 = arith.constant 0 : i32
    return %arg0, %c0_i32 : i32, i32
  }
  func.func @transform_1(%arg0: i32) -> (i32, i32) {
    %c0_i32 = arith.constant 0 : i32
    %c0_i32_0 = arith.constant 0 : i32
    return %arg0, %c0_i32 : i32, i32
  }
}

</mosaic_0001>

<llo_original>
// kernel: tpu_custom_call.1
$region0: #{tpu_custom_call.1}
  #allocation0 [shape = 'u32[]', space=smem, size = 0x4, offset = 0x4, fixed_abs, tag = 'smem constant byte address 0x4 - core index']
  #allocation1 [shape = 'u32[144,128]{1,0:T(1,128)}', space=vmem, size = 0x12000, scoped, tag = 'internal scratch']
  %s0 = inlined_call_operand.hbm [shape: f32[16,32], index: 0, kind: input, shape index: {}]
  %s1 = inlined_call_operand.hbm [shape: f32[16,32], index: 1, kind: output, shape index: {}]
  %s2 = sld [smem:[#allocation0]]
  $region18: #{tpu_custom_call.1} parent=0
    _
  %s4 = ssub.s32 1, %s2
  %s5 = scalar_select 0, %s4, %s2
  $region1: #{tpu_custom_call.1} parent=0
    #allocation2 [shape = 'u8[8192]{0}', space=vmem, size = 0x2000, scoped, tag = 'input window, operand 0, single buffered']
    #allocation3 [shape = 's32[1]{0}', space=sflag, size = 0x4, scoped, tag = 'scoped memory for tpu_custom_call.1']
    #allocation4 [shape = 's32[1]{0}', space=sflag, size = 0x4, scoped, tag = 'scoped memory for tpu_custom_call.1']
    #allocation5 [shape = 'u8[8192]{0}', space=vmem, size = 0x2000, scoped, tag = 'output window, operand 0, single buffered']
    %6 = vsyncpa [#allocation3], 0
    %7 = vsyncpa [#allocation4], 0
    // Predicated region
    $region2: #{tpu_custom_call.1} parent=1 // pred_check
      _
    $region3: #{tpu_custom_call.1} parent=1 // pred_check_branch
      %9 = sbr.rel (0) target = $region5
    $region4: #{tpu_custom_call.1} parent=1 // pred_region
      %s11 = ssub.s32 256, 256
      %12 = vsyncadd [#allocation3], %s11
      %s13 = sshll.u32 [#allocation2], 4
      %s14 = int_to_ptr.vmem [resolvable:$true] %s13
      %19 = dma.hbm_to_vmem [thread:$0]  %s0, 256, %s14, [#allocation3], 128, 128, 8
    $region5: #{tpu_custom_call.1} parent=1 // pred_fallthru
      _
    // Predicated region
    $region6: #{tpu_custom_call.1} parent=1 // pred_check
      _
    $region7: #{tpu_custom_call.1} parent=1 // pred_check_branch
      %21 = sbr.rel (0) target = $region9
    $region8: #{tpu_custom_call.1} parent=1 // pred_region
      %22 = dma.done [#allocation3], 256
    $region9: #{tpu_custom_call.1} parent=1 // pred_fallthru
      _
    %v23 = vld [vmem:[#allocation2] sm:$0xff]
    %v24 = vld [vmem:[#allocation2 + $0x8] sm:$0xff]
    %vm25 = vcmask 261120
    %v26 = vsel %vm25, %v23, 0.0
    %27 = vadd.xlane.f32.xlu0 %v26
    %v28 = vpop.xlane.xlu0 %27
    %v29 = vsel %vm25, %v24, 0.0
    %30 = vadd.xlane.f32.xlu0 %v29
    %v31 = vpop.xlane.xlu0 %30
    %v32 = vrcp.pop 32.0
    %v33 = vmul.f32 %v28, %v32
    %v34 = vmul.f32 %v31, %v32
    %v35 = vsub.f32 %v23, %v33
    %v36 = vsub.f32 %v24, %v34
    %v37 = vmul.f32 %v35, %v35
    %v38 = vmul.f32 %v36, %v36
    %v39 = vsel %vm25, %v37, 0.0
    %40 = vadd.xlane.f32.xlu0 %v39
    %v41 = vpop.xlane.xlu0 %40
    %v42 = vsel %vm25, %v38, 0.0
    %43 = vadd.xlane.f32.xlu0 %v42
    %v44 = vpop.xlane.xlu0 %43
    %v45 = vmul.f32 %v41, %v32
    %v46 = vmul.f32 %v44, %v32
    %v47 = vadd.f32 %v45, 1e-05
    %v48 = vadd.f32 %v46, 1e-05
    %v49 = vrsqrt.pop %v47
    %v50 = vrsqrt.pop %v48
    %v51 = vmul.f32 %v23, %v49
    %v52 = vmul.f32 %v24, %v50
    %v53 = vmul.f32 %v33, %v49
    %v54 = vmul.f32 %v34, %v50
    %v55 = vsub.f32 %v51, %v53
    %v56 = vsub.f32 %v52, %v54
    %57 = vst.msk [vmem:[#allocation5] sm:$0xff] %vm25, %v55
    %58 = vst.msk [vmem:[#allocation5 + $0x8] sm:$0xff] %vm25, %v56
    // Predicated region
    $region10: #{tpu_custom_call.1} parent=1 // pred_check
      _
    $region11: #{tpu_custom_call.1} parent=1 // pred_check_branch
      %60 = sbr.rel (0) target = $region13
    $region12: #{tpu_custom_call.1} parent=1 // pred_region
      %s62 = ssub.s32 256, 256
      %63 = vsyncadd [#allocation4], %s62
      %s64 = sshll.u32 [#allocation5], 4
      %s65 = int_to_ptr.vmem [resolvable:$true] %s64
      %70 = dma.vmem_to_hbm [thread:$0]  %s65, 256, %s1, [#allocation4], 128, 128, 8
    $region13: #{tpu_custom_call.1} parent=1 // pred_fallthru
      _
    // Predicated region
    $region14: #{tpu_custom_call.1} parent=1 // pred_check
      _
    $region15: #{tpu_custom_call.1} parent=1 // pred_check_branch
      %72 = sbr.rel (0) target = $region17
    $region16: #{tpu_custom_call.1} parent=1 // pred_region
      %73 = dma.done [#allocation4], 256
    $region17: #{tpu_custom_call.1} parent=1 // pred_fallthru
      _
    %74 = vsyncpa [#allocation3], 1
    %75 = vsyncpa [#allocation4], 1

</llo_original>
